<compile_context>
chip_gen: v5e
topology: v5e:2x2
jax: 0.10.0
libtpu: 0.0.40
codegen_flags: <defaults>
</compile_context>

<pallas_src>
import jax
import jax.numpy as jnp
from jax import lax
from jax.experimental import pallas as pl
from jax.experimental.pallas import tpu as pltpu

LANE = 128


def _round_up(x, m):
    return (x + m - 1) // m * m


# ---------------------------------------------------------------------------
# Kernel 1: Seq2Seq.make_src_mask
# ---------------------------------------------------------------------------
def _make_masks_kernel(grp_ref, src_mask_ref, trg_mask_ref):
    # grp_ref      : (B,) int32 in SMEM (scalar prefetch)
    # src_mask_ref : (1, 1, L)   int32 block for batch row b
    # trg_mask_ref : (1, L1, L1) int32 block for batch row b
    b = pl.program_id(0)
    g = grp_ref[b]

    L = src_mask_ref.shape[-1]
    L1 = trg_mask_ref.shape[-1]

    pos = lax.broadcasted_iota(jnp.int32, (1, 1, L), 2)
    src_mask_ref[...] = (pos < g).astype(jnp.int32)

    q = lax.broadcasted_iota(jnp.int32, (1, L1, L1), 1)
    k = lax.broadcasted_iota(jnp.int32, (1, L1, L1), 2)
    trg_mask_ref[...] = ((k <= g) & (k <= q)).astype(jnp.int32)


def make_src_mask(angle_group_num, max_len):
    """Pallas version of Seq2Seq.make_src_mask.

    angle_group_num: (B,) int32; max_len: static int == max(angle_group_num).
    Returns (src_mask (B,1,1,L) bool, trg_mask (B,1,L+1,L+1) bool).
    """
    B = angle_group_num.shape[0]
    L, L1 = max_len, max_len + 1
    grp = angle_group_num.astype(jnp.int32)

    grid_spec = pltpu.PrefetchScalarGridSpec(
        num_scalar_prefetch=1,
        grid=(B,),
        in_specs=[],
        out_specs=(
            pl.BlockSpec((1, 1, L), lambda b, grp_ref: (b, 0, 0)),
            pl.BlockSpec((1, L1, L1), lambda b, grp_ref: (b, 0, 0)),
        ),
    )
    src_i, trg_i = pl.pallas_call(
        _make_masks_kernel,
        grid_spec=grid_spec,
        out_shape=(
            jax.ShapeDtypeStruct((B, 1, L), jnp.int32),
            jax.ShapeDtypeStruct((B, L1, L1), jnp.int32),
        ),
        compiler_params=pltpu.CompilerParams(dimension_semantics=("parallel",)),
    )(grp)
    src_mask = src_i.astype(jnp.bool_).reshape(B, 1, 1, L)
    trg_mask = trg_i.astype(jnp.bool_).reshape(B, 1, L1, L1)
    return src_mask, trg_mask


# ---------------------------------------------------------------------------
# Kernel 2: fused Embedding -> fc1 -> ReLU -> (dropout=id) -> fc2 -> *4
# ---------------------------------------------------------------------------
def _embed_ffn_kernel(ids_ref, emb_row_ref, w1_ref, b1_ref, w2_ref, b2_ref,
                      o_ref, e_scratch):
    # ids_ref     : (Np,) int32 in SMEM (scalar prefetch; also drives index_maps)
    # emb_row_ref : (1, 1, Dp) bf16   embedding row of token (i*TM + j)
    # w1_ref      : (Dp, Hp) bf16    b1_ref : (1, Hp) f32
    # w2_ref      : (Hp, Op) bf16    b2_ref : (1, Op) f32
    # o_ref       : (TM, Op) f32     output row-tile (revisited across axis j)
    # e_scratch   : (TM, Dp) f32     gathered embedding rows of the current tile
    j = pl.program_id(1)

    # (1) gather: stage this token's embedding row into row j of the tile.
    e_scratch[pl.ds(j, 1), :] = emb_row_ref[0].astype(jnp.float32)

    # (2)+(3) once the tile is fully gathered, run the fused MLP on the MXU.
    @pl.when(j == pl.num_programs(1) - 1)
    def _():
        e = e_scratch[...].astype(jnp.bfloat16)
        h = jnp.dot(e, w1_ref[...], preferred_element_type=jnp.float32)
        h = jnp.maximum(h + b1_ref[...], 0.0)
        # TODO(synk): training-mode dropout (stochastic masking via
        # pltpu.prng_random_bits) omitted; eval-mode dropout is the identity.
        y = jnp.dot(h.astype(jnp.bfloat16), w2_ref[...],
                    preferred_element_type=jnp.float32)
        o_ref[...] = ((y + b2_ref[...]) * 4.0).astype(o_ref.dtype)


def embed_ffn_forward(tokens, emb_table, w1, b1, w2, b2, *, row_tile=256):
    """y = fc2(relu(fc1(Embedding(tokens)))) * 4, fused in one Pallas kernel.

    tokens: (B, S) int32 ids.  Returns (B, S, out_dim) float32.
    """
    B, S = tokens.shape
    N = B * S
    V, D = emb_table.shape
    H = w1.shape[1]
    O = w2.shape[1]

    # ---- lane-dense zero padding of every feature dim to a multiple of 128 ----
    Dp, Hp, Op = _round_up(D, LANE), _round_up(H, LANE), _round_up(O, LANE)
    emb_p = jnp.zeros((V, 1, Dp), jnp.bfloat16).at[:, 0, :D].set(
        emb_table.astype(jnp.bfloat16))
    w1_p = jnp.zeros((Dp, Hp), jnp.bfloat16).at[:D, :H].set(w1.astype(jnp.bfloat16))
    b1_p = jnp.zeros((1, Hp), jnp.float32).at[0, :H].set(b1.astype(jnp.float32))
    w2_p = jnp.zeros((Hp, Op), jnp.bfloat16).at[:H, :O].set(w2.astype(jnp.bfloat16))
    b2_p = jnp.zeros((1, Op), jnp.float32).at[0, :O].set(b2.astype(jnp.float32))

    # ---- row tiling ----
    TM = max(8, min(row_tile, _round_up(N, 8)))
    TM = _round_up(TM, 8)
    Np = _round_up(N, TM)
    ids = jnp.zeros((Np,), jnp.int32).at[:N].set(tokens.reshape(N).astype(jnp.int32))
    n_tiles = Np // TM

    grid_spec = pltpu.PrefetchScalarGridSpec(
        num_scalar_prefetch=1,
        grid=(n_tiles, TM),
        in_specs=[
            # Embedding table stays in HBM; only the row of token (i*TM + j)
            # is DMA'd each inner step, addressed by the SMEM-prefetched ids.
            pl.BlockSpec((1, 1, Dp),
                         lambda i, j, ids_ref: (ids_ref[i * TM + j], 0, 0)),
            pl.BlockSpec((Dp, Hp), lambda i, j, ids_ref: (0, 0)),
            pl.BlockSpec((1, Hp), lambda i, j, ids_ref: (0, 0)),
            pl.BlockSpec((Hp, Op), lambda i, j, ids_ref: (0, 0)),
            pl.BlockSpec((1, Op), lambda i, j, ids_ref: (0, 0)),
        ],
        out_specs=pl.BlockSpec((TM, Op), lambda i, j, ids_ref: (i, 0)),
        scratch_shapes=[pltpu.VMEM((TM, Dp), jnp.float32)],
    )

    out = pl.pallas_call(
        _embed_ffn_kernel,
        grid_spec=grid_spec,
        out_shape=jax.ShapeDtypeStruct((Np, Op), jnp.float32),
        compiler_params=pltpu.CompilerParams(
            dimension_semantics=("parallel", "arbitrary"),
            vmem_limit_bytes=32 * 1024 * 1024,
        ),
    )(ids, emb_p, w1_p, b1_p, w2_p, b2_p)

    return out[:N, :O].reshape(B, S, O)


if __name__ == "__main__":
    key = jax.random.PRNGKey(0)
    k_tok, k_emb, k_w1, k_b1, k_w2, k_b2 = jax.random.split(key, 6)

    # Small shapes consistent with the module.
    pf_dim1, pf_dim2, output_dim, vocab = 32, 64, 32, 16
    B, S = 2, 8

    # ---------------- Seq2Seq.make_src_mask ---------------------------------
    angle_group_num = [5, 8]                      # per-molecule group counts
    L = max(angle_group_num)
    grp = jnp.asarray(angle_group_num, jnp.int32)
    src_mask, trg_mask = make_src_mask(grp, L)
    src_mask, trg_mask = jax.block_until_ready((src_mask, trg_mask))

    # pure-JAX reference of the PyTorch mask logic
    ar_L = jnp.arange(L)
    ar_L1 = jnp.arange(L + 1)
    src_ref = (ar_L[None, :] < grp[:, None]).reshape(B, 1, 1, L)
    row_ok = ar_L1[None, :] <= grp[:, None]
    tril = jnp.tril(jnp.ones((L + 1, L + 1), jnp.bool_))
    trg_ref = row_ok[:, None, None, :] & tril[None, None, :, :]
    assert src_mask.shape == (B, 1, 1, L)
    assert trg_mask.shape == (B, 1, L + 1, L + 1)
    assert bool(jnp.array_equal(src_mask, src_ref))
    assert bool(jnp.array_equal(trg_mask, trg_ref))

    # -------- fused Embedding + position-wise FFN sub-block (reviewed) ------
    tokens = jax.random.randint(k_tok, (B, S), 0, vocab, dtype=jnp.int32)
    emb_table = jax.random.normal(k_emb, (vocab, pf_dim1), jnp.float32)
    # nn.Linear stores (out, in); we keep (in, out) for x @ W.
    w1 = jax.random.normal(k_w1, (pf_dim1, pf_dim2), jnp.float32) * 0.1
    b1 = jax.random.normal(k_b1, (pf_dim2,), jnp.float32) * 0.1
    w2 = jax.random.normal(k_w2, (pf_dim2, output_dim), jnp.float32) * 0.1
    b2 = jax.random.normal(k_b2, (output_dim,), jnp.float32) * 0.1

    y = embed_ffn_forward(tokens, emb_table, w1, b1, w2, b2, row_tile=8)
    y = jax.block_until_ready(y)

    # pure-JAX reference mirroring the kernel's bf16-weight / f32-accumulate math
    emb_bf = emb_table.astype(jnp.bfloat16).astype(jnp.float32)
    w1_bf = w1.astype(jnp.bfloat16).astype(jnp.float32)
    w2_bf = w2.astype(jnp.bfloat16).astype(jnp.float32)
    e_ref = jnp.take(emb_bf, tokens, axis=0)
    h_ref = jnp.maximum(e_ref @ w1_bf + b1, 0.0)
    h_ref = h_ref.astype(jnp.bfloat16).astype(jnp.float32)
    y_ref = (h_ref @ w2_bf + b2) * 4.0

    assert y.shape == (B, S, output_dim)
    assert jnp.allclose(y, y_ref, atol=2e-2, rtol=2e-2), float(
        jnp.max(jnp.abs(y - y_ref)))

    # TODO(synk): Seq2Seq.encoder / Seq2Seq.decoder are injected nn.Modules whose
    # definitions are not part of this spec; their attention stacks are not
    # translated here.

    print("KERNEL_OK")
</pallas_src>

<mosaic_0001>
module attributes {stable_mosaic.version = 11 : i64} {
  func.func @_make_masks_kernel(%arg0: i32, %arg1: memref<2xi32, #tpu.memory_space<smem>>, %arg2: memref<1x1x8xi32, #tpu.memory_space<vmem>>, %arg3: memref<1x9x9xi32, #tpu.memory_space<vmem>>) attributes {dimension_semantics = [#tpu.dimension_semantics<parallel>], iteration_bounds = array<i64: 2>, scalar_prefetch = 1 : i64, scratch_operands = 0 : i64, tpu.core_type = #tpu.core_type<tc>, window_params = [{transform_indices = @transform_0, window_bounds = array<i64: 1, 1, 8>}, {transform_indices = @transform_1, window_bounds = array<i64: 1, 9, 9>}]} {
    %0 = arith.index_cast %arg0 : i32 to index
    %1 = memref.load %arg1[%0] : memref<2xi32, #tpu.memory_space<smem>>
    %2 = tpu.iota {dimensions = array<i32: 2>} : vector<1x1x8xi32>
    %3 = vector.broadcast %1 : i32 to vector<1x1x8xi32>
    %4 = arith.cmpi slt, %2, %3 : vector<1x1x8xi32>
    %5 = arith.extui %4 : vector<1x1x8xi1> to vector<1x1x8xi32>
    %c0 = arith.constant 0 : index
    %c0_0 = arith.constant 0 : index
    %c0_1 = arith.constant 0 : index
    %6 = vector.load %arg2[%c0, %c0_0, %c0_1] : memref<1x1x8xi32, #tpu.memory_space<vmem>>, vector<1x1x8xi32>
    tpu.vector_store %arg2[%c0, %c0_0, %c0_1], %5 {strides = array<i32>} : memref<1x1x8xi32, #tpu.memory_space<vmem>>, vector<1x1x8xi32>,
    %7 = tpu.iota {dimensions = array<i32: 1>} : vector<1x9x9xi32>
    %8 = tpu.iota {dimensions = array<i32: 2>} : vector<1x9x9xi32>
    %9 = vector.broadcast %1 : i32 to vector<1x9x9xi32>
    %10 = arith.cmpi sle, %8, %9 : vector<1x9x9xi32>
    %11 = arith.cmpi sle, %8, %7 : vector<1x9x9xi32>
    %12 = arith.andi %10, %11 : vector<1x9x9xi1>
    %13 = arith.extui %12 : vector<1x9x9xi1> to vector<1x9x9xi32>
    %c0_2 = arith.constant 0 : index
    %c0_3 = arith.constant 0 : index
    %c0_4 = arith.constant 0 : index
    %14 = vector.load %arg3[%c0_2, %c0_3, %c0_4] : memref<1x9x9xi32, #tpu.memory_space<vmem>>, vector<1x9x9xi32>
    tpu.vector_store %arg3[%c0_2, %c0_3, %c0_4], %13 {strides = array<i32>} : memref<1x9x9xi32, #tpu.memory_space<vmem>>, vector<1x9x9xi32>,
    return
  }
  func.func @transform_0(%arg0: i32, %arg1: memref<2xi32, #tpu.memory_space<smem>>) -> (i32, i32, i32) {
    %c0_i32 = arith.constant 0 : i32
    %c0_i32_0 = arith.constant 0 : i32
    %c0_i32_1 = arith.constant 0 : i32
    return %arg0, %c0_i32, %c0_i32_0 : i32, i32, i32
  }
  func.func @transform_1(%arg0: i32, %arg1: memref<2xi32, #tpu.memory_space<smem>>) -> (i32, i32, i32) {
    %c0_i32 = arith.constant 0 : i32
    %c0_i32_0 = arith.constant 0 : i32
    %c0_i32_1 = arith.constant 0 : i32
    return %arg0, %c0_i32, %c0_i32_0 : i32, i32, i32
  }
}

</mosaic_0001>

<llo_original>
// kernel: tpu_custom_call.1
$region0: #{tpu_custom_call.1}
  #allocation0 [shape = 'u32[]', space=smem, size = 0x4, offset = 0x4, fixed_abs, tag = 'smem constant byte address 0x4 - core index']
  #allocation1 [shape = 'u32[72,128]{1,0:T(1,128)}', space=vmem, size = 0x9000, scoped, tag = 'internal scratch']
  #allocation2 [shape = 's32[1]{0}', space=sflag, size = 0x4, scoped, tag = 'scoped memory for tpu_custom_call.1']
  #allocation3 [shape = 'u8[512]{0}', space=smem, size = 0x200, scoped, tag = 'prefetched SMEM operand 0']
  %s0 = inlined_call_operand.hbm [shape: s32[2], index: 0, kind: input, shape index: {}]
  %s1 = inlined_call_operand.hbm [shape: s32[2,1,8], index: 1, kind: output, shape index: {0}]
  %s2 = inlined_call_operand.vmem [shape: s32[2,9,9], index: 2, kind: output, shape index: {1}]
  %3 = xla_tuple %s1, %s2
  %s4 = sld [smem:[#allocation0]]
  $region33: #{tpu_custom_call.1} parent=0
    _
  %s6 = ssub.s32 1, %s4
  %s7 = scalar_select 0, %s6, %s4
  %s9 = sshll.u32 %s0, 4
  %s10 = int_to_ptr.hbm [resolvable:$true] %s9
  %12 = dma.hbm_to_smem %s10, 16, [#allocation3], [#allocation2]
  %14 = dma.done [#allocation2], 16
  %15 = sfence
  $region1: #{tpu_custom_call.1} parent=0
    #allocation4 [shape = 'u8[1024]{0}', space=vmem, size = 0x400, scoped, tag = 'output window, operand 0']
    #allocation5 [shape = 's32[2]{0}', space=sflag, size = 0x8, scoped, tag = 'scoped memory for tpu_custom_call.1']
    %16 = vsyncpa [#allocation5], 0
    %s17 = scalar_lea.sflag [#allocation5], 1
    %18 = vsyncpa %s17, 0
    loop: start=0, step=1, limit=3
    $region2: #{tpu_custom_call.1} parent=1 // loop_pre_header
      _
    $region3: #{tpu_custom_call.1} parent=1 // loop_header
      %s20 = sphi 0, %s24
      %p21 = scmp.ge.s32.totalorder %s20, 3
      %s29 = sphi 0, %s31
      %s32 = sphi 0, %s29
      %s42 = sphi 0, %s32
      %s48 = sphi 0, %s50
      %s51 = sphi 0, %s48
      %s61 = sphi 0, %s51
    $region4: #{tpu_custom_call.1} parent=1 // loop_header_branch
      %23 = sbr.rel (%p21) target = $region8
    $region5: #{tpu_custom_call.1} parent=1 // loop_body
      %s25 = ssub.s32 %s20, 1
      %s26 = sadd.s32 %s20, 1
      %s27 = ssub.s32 %s20, %s26
      %p28 = scmp.eq.s32.totalorder %s27, 0
      %s30 = sadd.s32 %s29, 1
      %s31 = scalar_select %p28, %s29, %s30
      %p33 = pneg %p28
      %p34 = scmp.eq.s32.totalorder %s20, 1
      %p35 = por %p33, %p34
      %p36 = scmp.ne.s32.totalorder %s29, %s32
      %p37 = scmp.eq.s32.totalorder %s20, 0
      %p38 = por %p36, %p37
      %p39 = scmp.ne.s32.totalorder %s29, %s32
      %p40 = scmp.eq.s32.totalorder %s25, 1
      %p41 = por %p39, %p40
      %p43 = scmp.ne.s32.totalorder %s32, %s42
      %p44 = scmp.eq.s32.totalorder %s25, 0
      %p45 = por %p43, %p44
      %s46 = ssub.s32 %s20, %s26
      %p47 = scmp.eq.s32.totalorder %s46, 0
      %s49 = sadd.s32 %s48, 1
      %s50 = scalar_select %p47, %s48, %s49
      %p52 = pneg %p47
      %p53 = scmp.eq.s32.totalorder %s20, 1
      %p54 = por %p52, %p53
      %p55 = scmp.ne.s32.totalorder %s48, %s51
      %p56 = scmp.eq.s32.totalorder %s20, 0
      %p57 = por %p55, %p56
      %p58 = scmp.ne.s32.totalorder %s48, %s51
      %p59 = scmp.eq.s32.totalorder %s25, 1
      %p60 = por %p58, %p59
      %p62 = scmp.ne.s32.totalorder %s51, %s61
      %p63 = scmp.eq.s32.totalorder %s25, 0
      %p64 = por %p62, %p63
      %p65 = scmp.lt.s32.totalorder %s20, 2
      // Predicated region
      $region9: #{tpu_custom_call.1} parent=5 // pred_check
        %p66 = pneg %p65
      $region10: #{tpu_custom_call.1} parent=5 // pred_check_branch
        %68 = sbr.rel (%p66) target = $region12
      $region11: #{tpu_custom_call.1} parent=5 // pred_region
        %p69 = pneg %p38
        %p70 = pneg %p35
        %s71 = sand.u32 %s29, 1
        %s72 = scalar_lea.sflag [#allocation5], %s71
        %s73 = sand.u32 %s29, 1
        %s74 = scalar_lea.vmem [#allocation4], %s73
        %p75 = pneg %p57
        %p76 = pneg %p54
        %p77 = scmp.lt.s32.totalorder %s20, 1
        %s78 = scalar_select %p77, %s20, 1
        %s79 = smul.addr %s78, 2
        %s80 = smul.addr %s79, 8
        %s81 = scalar_lea.vmem %s2, %s80
        %p82 = scmp.lt.s32.totalorder %s20, 1
        %s83 = scalar_select %p82, %s20, 1
        %s84 = smul.addr %s83, 2
        %s85 = smul.addr %s84, 8
        %s86 = scalar_lea.vmem %s2, %s85
        %s87 = sld [smem:[#allocation3 + %s20]]
        %v88 = vlaneseq
        %v89 = vand.u32 %v88, 127
        %v90 = vstv %s87
        %vm91 = vcmp.lt.s32.totalorder %v89, %v90
        %v92 = vsel %vm91, 1, 0
        %vm93 = vcmask 57344
        %94 = vst.msk [vmem:[%s74] sm:$0x1] %vm93, %v92
        %v95 = vlaneseq
        %v96 = vshrl.u32 %v95, 7
        %v97 = vadd.s32 %v96, 8
        %vm98 = vcmp.le.s32.totalorder %v89, %v90
        %vm99 = vcmp.le.s32.totalorder %v89, %v96
        %vm100 = vcmp.le.s32.totalorder %v89, %v97
        %vm101 = vmand %vm98, %vm99
        %vm102 = vmand %vm98, %vm100
        %v103 = vsel %vm101, 1, 0
        %v104 = vsel %vm102, 1, 0
        %vm105 = vcmask 72704
        %106 = vst.msk [vmem:[%s86] sm:$0xff] %vm105, %v103
        %vm107 = vcmask 65536
        %108 = vst.msk [vmem:[%s86 + $0x8] sm:$0x1] %vm107, %v104
        %s109 = sand.u32 %s29, 1
        %s110 = scalar_lea.sflag [#allocation5], %s109
        %s111 = sand.u32 %s29, 1
        %s112 = scalar_lea.vmem [#allocation4], %s111
        %p113 = scmp.lt.s32.totalorder %s20, 1
        %s114 = scalar_select %p113, %s20, 1
        %s115 = smul.addr %s114, 2
        %s116 = smul.addr %s115, 8
        %s117 = scalar_lea.vmem %s2, %s116
        // Predicated region
        $region13: #{tpu_custom_call.1} parent=11 // pred_check
          %p118 = pneg %p35
        $region14: #{tpu_custom_call.1} parent=11 // pred_check_branch
          %120 = sbr.rel (%p118) target = $region16
        $region15: #{tpu_custom_call.1} parent=11 // pred_region
          %122 = vsyncadd %s110, 0
          %s123 = scalar_lea.hbm %s1, %s20
          %s125 = sshll.u32 %s112, 4
          %s126 = int_to_ptr.vmem [resolvable:$true] %s125
          %s127 = sshll.u32 %s123, 4
          %s128 = int_to_ptr.hbm [resolvable:$true] %s127
          %130 = dma.vmem_to_hbm [thread:$0]  %s126, 16, %s128, %s110
        $region16: #{tpu_custom_call.1} parent=11 // pred_fallthru
          _
        // Predicated region
        $region17: #{tpu_custom_call.1} parent=11 // pred_check
          %p131 = pneg %p54
        $region18: #{tpu_custom_call.1} parent=11 // pred_check_branch
          %133 = sbr.rel (%p131) target = $region20
        $region19: #{tpu_custom_call.1} parent=11 // pred_region
          _
        $region20: #{tpu_custom_call.1} parent=11 // pred_fallthru
          _
      $region12: #{tpu_custom_call.1} parent=5 // pred_fallthru
        _
      %p134 = scmp.le.s32.totalorder 1, %s20
      // Predicated region
      $region21: #{tpu_custom_call.1} parent=5 // pred_check
        %p135 = pneg %p134
      $region22: #{tpu_custom_call.1} parent=5 // pred_check_branch
        %137 = sbr.rel (%p135) target = $region24
      $region23: #{tpu_custom_call.1} parent=5 // pred_region
        %s138 = ssub.s32 %s20, 1
        // Predicated region
        $region25: #{tpu_custom_call.1} parent=23 // pred_check
          %p139 = pneg %p41
        $region26: #{tpu_custom_call.1} parent=23 // pred_check_branch
          %141 = sbr.rel (%p139) target = $region28
        $region27: #{tpu_custom_call.1} parent=23 // pred_region
          %s142 = sand.u32 %s32, 1
          %s143 = scalar_lea.sflag [#allocation5], %s142
          %s144 = sand.u32 %s32, 1
          %s145 = scalar_lea.vmem [#allocation4], %s144
          %147 = dma.done %s143, 16
        $region28: #{tpu_custom_call.1} parent=23 // pred_fallthru
          _
        // Predicated region
        $region29: #{tpu_custom_call.1} parent=23 // pred_check
          %p148 = pneg %p60
        $region30: #{tpu_custom_call.1} parent=23 // pred_check_branch
          %150 = sbr.rel (%p148) target = $region32
        $region31: #{tpu_custom_call.1} parent=23 // pred_region
          %p151 = scmp.lt.s32.totalorder %s25, 1
          %s152 = scalar_select %p151, %s25, 1
          %s153 = smul.addr %s152, 2
          %s154 = smul.addr %s153, 8
          %s155 = scalar_lea.vmem %s2, %s154
        $region32: #{tpu_custom_call.1} parent=23 // pred_fallthru
          _
      $region24: #{tpu_custom_call.1} parent=5 // pred_fallthru
        _
    $region6: #{tpu_custom_call.1} parent=1 // loop_footer
      %s24 = sadd.s32 1, %s20
    $region7: #{tpu_custom_call.1} parent=1 // loop_footer_branch
      %19 = sbr.rel target = $region3
    $region8: #{tpu_custom_call.1} parent=1 // loop_exit
      _
    %156 = vsyncpa [#allocation5], 1
    %s157 = scalar_lea.sflag [#allocation5], 1
    %158 = vsyncpa %s157, 1

</llo_original>
